<compile_context>
chip_gen: v6e
topology: v6e:2x2x1
jax: 0.10.0
libtpu: 0.0.40
codegen_flags: <defaults>
</compile_context>

<pallas_src>
import functools

import jax
import jax.numpy as jnp
from jax.experimental import pallas as pl
from jax.experimental.pallas import tpu as pltpu


def _value_loss_kernel(*refs, B, S, clip_eps, has_mask):
    if has_mask:
        v_ref, ov_ref, adv_ref, m_ref, num_ref, den_ref, acc_num, acc_den = refs
    else:
        v_ref, ov_ref, adv_ref, num_ref, den_ref, acc_num, acc_den = refs
        m_ref = None

    i = pl.program_id(0)          # batch-tile index  ("parallel")
    j = pl.program_id(1)          # sequence-tile index ("arbitrary", reduction)

    # Re-initialize the per-B-tile accumulators at the start of the reduction.
    @pl.when(j == 0)
    def _():
        acc_num[...] = jnp.zeros_like(acc_num)
        acc_den[...] = jnp.zeros_like(acc_den)

    # Load in native dtype, compute in f32 (v5e has no bf16 VPU path).
    v = v_ref[...].astype(jnp.float32)
    ov = ov_ref[...].astype(jnp.float32)
    adv = adv_ref[...].astype(jnp.float32)

    tb, ts = v.shape
    row = i * tb + jax.lax.broadcasted_iota(jnp.int32, (tb, ts), 0)
    col = j * ts + jax.lax.broadcasted_iota(jnp.int32, (tb, ts), 1)
    valid = jnp.logical_and(row < B, col < S)          # guards OOB tile padding

    # Fused algebra: vclip - returns = clip(d) - adv ;  v - returns = d - adv.
    d = v - ov
    dc = jnp.clip(d, -clip_eps, clip_eps)
    s1 = (dc - adv) ** 2
    s2 = (d - adv) ** 2
    surr = jnp.maximum(s1, s2)

    if has_mask:
        am = m_ref[...].astype(jnp.float32)
        contrib = surr * am
        cnt = am
    else:
        contrib = surr
        cnt = jnp.ones_like(surr)

    contrib = jnp.where(valid, contrib, 0.0)
    cnt = jnp.where(valid, cnt, 0.0)

    acc_num[...] += jnp.sum(contrib, keepdims=True)    # (1, 1)
    acc_den[...] += jnp.sum(cnt, keepdims=True)        # (1, 1)

    # Finalize this B-tile's partial sums into lane/sublane-dense output blocks.
    @pl.when(j == pl.num_programs(1) - 1)
    def _():
        num_ref[...] = jnp.broadcast_to(acc_num[...], num_ref.shape)
        den_ref[...] = jnp.broadcast_to(acc_den[...], den_ref.shape)


def value_loss(values, old_values, advantage, action_mask=None,
               clip_eps=0.2, tile_b=None, tile_s=None):
    """0.5 * masked-mean of max(clipped, unclipped) squared value error."""
    B, S = values.shape

    # Tile choice: largest aligned tiles that comfortably fit v7x's scoped VMEM
    # (<= ~2 MiB / stream, double-buffered). Full-dim tiles are always legal.
    if tile_b is None:
        tile_b = B if B <= 64 else 64          # multiple of 8 / 16 / 32 when tiled
    if tile_s is None:
        tile_s = S if S <= 1024 else 1024      # multiple of 128 when tiled
    n_bt = pl.cdiv(B, tile_b)
    n_st = pl.cdiv(S, tile_s)

    has_mask = action_mask is not None
    if has_mask and action_mask.dtype == jnp.bool_:
        # Same byte width as bool storage; avoids i1 vector-layout corner cases.
        action_mask = action_mask.astype(jnp.int8)

    kernel = functools.partial(_value_loss_kernel, B=B, S=S,
                               clip_eps=float(clip_eps), has_mask=has_mask)

    in_block = pl.BlockSpec((tile_b, tile_s), lambda i, j: (i, j))
    in_specs = [in_block, in_block, in_block]
    inputs = [values, old_values, advantage]
    if has_mask:
        in_specs.append(in_block)
        inputs.append(action_mask)

    # Per-B-tile partial sums packed into full (8,128) vregs -> unmasked stores.
    out_block = pl.BlockSpec((1, 8, 128), lambda i, j: (i, 0, 0))
    out_shape = (jax.ShapeDtypeStruct((n_bt, 8, 128), jnp.float32),
                 jax.ShapeDtypeStruct((n_bt, 8, 128), jnp.float32))

    bytes_accessed = (sum(int(x.size) * x.dtype.itemsize for x in inputs)
                      + 2 * n_bt * 8 * 128 * 4)
    cost = pl.CostEstimate(flops=10 * B * S, transcendentals=0,
                           bytes_accessed=bytes_accessed)

    num_out, den_out = pl.pallas_call(
        kernel,
        out_shape=out_shape,
        grid_spec=pltpu.PrefetchScalarGridSpec(
            num_scalar_prefetch=0,
            grid=(n_bt, n_st),
            in_specs=in_specs,
            out_specs=(out_block, out_block),
            scratch_shapes=[pltpu.VMEM((1, 1), jnp.float32),
                            pltpu.VMEM((1, 1), jnp.float32)]),
        compiler_params=pltpu.CompilerParams(
            dimension_semantics=("parallel", "arbitrary")),
        cost_estimate=cost,
    )(*inputs)

    # Tiny cross-B-tile combine (n_bt scalars) + the single division.
    num = jnp.sum(num_out[:, 0, 0])
    den = jnp.sum(den_out[:, 0, 0])
    return 0.5 * num / den


def _value_loss_ref(values, old_values, advantage, action_mask=None,
                    clip_eps=0.2):
    v = values.astype(jnp.float32)
    ov = old_values.astype(jnp.float32)
    adv = advantage.astype(jnp.float32)
    returns = adv + ov
    vclip = ov + jnp.clip(v - ov, -clip_eps, clip_eps)
    surr = jnp.maximum((vclip - returns) ** 2, (v - returns) ** 2)
    if action_mask is not None:
        am = action_mask.astype(jnp.float32)
        loss = jnp.sum(surr / jnp.sum(am) * am)
    else:
        loss = jnp.mean(surr)
    return 0.5 * loss


if __name__ == "__main__":
    B, S = 8, 500                        # S not a multiple of 128 -> exercises
    key = jax.random.PRNGKey(0)          # the in-kernel bounds masking.
    k1, k2, k3, k4 = jax.random.split(key, 4)

    values = jax.random.normal(k1, (B, S), jnp.float32).astype(jnp.bfloat16)
    old_values = jax.random.normal(k2, (B, S), jnp.float32).astype(jnp.bfloat16)
    advantage = jax.random.normal(k3, (B, S), jnp.float32).astype(jnp.bfloat16)
    action_mask = jax.random.uniform(k4, (B, S)) > 0.3          # bool mask

    # Small tiles so the demo exercises the (B_tiles, S_tiles) reduction grid.
    loss = value_loss(values, old_values, advantage, action_mask,
                      clip_eps=0.2, tile_b=8, tile_s=128)
    loss_nomask = value_loss(values, old_values, advantage, None,
                             clip_eps=0.2, tile_b=8, tile_s=128)
    jax.block_until_ready((loss, loss_nomask))

    ref = _value_loss_ref(values, old_values, advantage, action_mask, 0.2)
    ref_nm = _value_loss_ref(values, old_values, advantage, None, 0.2)
    assert jnp.allclose(loss, ref, atol=1e-5, rtol=1e-4), (loss, ref)
    assert jnp.allclose(loss_nomask, ref_nm, atol=1e-5, rtol=1e-4), (
        loss_nomask, ref_nm)

    print("KERNEL_OK")
</pallas_src>

<mosaic_0001>
module attributes {stable_mosaic.version = 11 : i64} {
  func.func @_value_loss_kernel(%arg0: i32, %arg1: i32, %arg2: memref<8x128xbf16, #tpu.memory_space<vmem>>, %arg3: memref<8x128xbf16, #tpu.memory_space<vmem>>, %arg4: memref<8x128xbf16, #tpu.memory_space<vmem>>, %arg5: memref<8x128xi8, #tpu.memory_space<vmem>>, %arg6: memref<1x8x128xf32, #tpu.memory_space<vmem>>, %arg7: memref<1x8x128xf32, #tpu.memory_space<vmem>>, %arg8: memref<1x1xf32, #tpu.memory_space<vmem>>, %arg9: memref<1x1xf32, #tpu.memory_space<vmem>>) attributes {dimension_semantics = [#tpu.dimension_semantics<parallel>, #tpu.dimension_semantics<arbitrary>], iteration_bounds = array<i64: 1, 4>, scalar_prefetch = 0 : i64, scratch_operands = 2 : i64, tpu.core_type = #tpu.core_type<tc>, window_params = [{transform_indices = @transform_0, window_bounds = array<i64: 8, 128>}, {transform_indices = @transform_1, window_bounds = array<i64: 8, 128>}, {transform_indices = @transform_2, window_bounds = array<i64: 8, 128>}, {transform_indices = @transform_3, window_bounds = array<i64: 8, 128>}, {transform_indices = @transform_4, window_bounds = array<i64: 1, 8, 128>}, {transform_indices = @transform_5, window_bounds = array<i64: 1, 8, 128>}]} {
    %c0_i32 = arith.constant 0 : i32
    %0 = arith.cmpi eq, %arg1, %c0_i32 : i32
    %1 = arith.extui %0 : i1 to i32
    %c0_i32_0 = arith.constant 0 : i32
    %2 = arith.cmpi ne, %1, %c0_i32_0 : i32
    scf.if %2 {
      %cst_23 = arith.constant 0.000000e+00 : f32
      %58 = vector.broadcast %cst_23 : f32 to vector<1x1xf32>
      %c0_24 = arith.constant 0 : index
      %c0_25 = arith.constant 0 : index
      %59 = vector.load %arg8[%c0_24, %c0_25] : memref<1x1xf32, #tpu.memory_space<vmem>>, vector<1x1xf32>
      tpu.vector_store %arg8[%c0_24, %c0_25], %58 {strides = array<i32>} : memref<1x1xf32, #tpu.memory_space<vmem>>, vector<1x1xf32>,
      %cst_26 = arith.constant 0.000000e+00 : f32
      %60 = vector.broadcast %cst_26 : f32 to vector<1x1xf32>
      %c0_27 = arith.constant 0 : index
      %c0_28 = arith.constant 0 : index
      %61 = vector.load %arg9[%c0_27, %c0_28] : memref<1x1xf32, #tpu.memory_space<vmem>>, vector<1x1xf32>
      tpu.vector_store %arg9[%c0_27, %c0_28], %60 {strides = array<i32>} : memref<1x1xf32, #tpu.memory_space<vmem>>, vector<1x1xf32>,
    } else {
    }
    %c0 = arith.constant 0 : index
    %c0_1 = arith.constant 0 : index
    %3 = vector.load %arg2[%c0, %c0_1] : memref<8x128xbf16, #tpu.memory_space<vmem>>, vector<8x128xbf16>
    %4 = arith.extf %3 : vector<8x128xbf16> to vector<8x128xf32>
    %c0_2 = arith.constant 0 : index
    %c0_3 = arith.constant 0 : index
    %5 = vector.load %arg3[%c0_2, %c0_3] : memref<8x128xbf16, #tpu.memory_space<vmem>>, vector<8x128xbf16>
    %6 = arith.extf %5 : vector<8x128xbf16> to vector<8x128xf32>
    %c0_4 = arith.constant 0 : index
    %c0_5 = arith.constant 0 : index
    %7 = vector.load %arg4[%c0_4, %c0_5] : memref<8x128xbf16, #tpu.memory_space<vmem>>, vector<8x128xbf16>
    %8 = arith.extf %7 : vector<8x128xbf16> to vector<8x128xf32>
    %c8_i32 = arith.constant 8 : i32
    %9 = arith.muli %arg0, %c8_i32 : i32
    %10 = tpu.iota {dimensions = array<i32: 0>} : vector<8x128xi32>
    %11 = vector.broadcast %9 : i32 to vector<8x128xi32>
    %12 = arith.addi %11, %10 : vector<8x128xi32>
    %c128_i32 = arith.constant 128 : i32
    %13 = arith.muli %arg1, %c128_i32 : i32
    %14 = tpu.iota {dimensions = array<i32: 1>} : vector<8x128xi32>
    %15 = vector.broadcast %13 : i32 to vector<8x128xi32>
    %16 = arith.addi %15, %14 : vector<8x128xi32>
    %c8_i32_6 = arith.constant 8 : i32
    %17 = vector.broadcast %c8_i32_6 : i32 to vector<8x128xi32>
    %18 = arith.cmpi slt, %12, %17 : vector<8x128xi32>
    %c500_i32 = arith.constant 500 : i32
    %19 = vector.broadcast %c500_i32 : i32 to vector<8x128xi32>
    %20 = arith.cmpi slt, %16, %19 : vector<8x128xi32>
    %21 = arith.andi %18, %20 : vector<8x128xi1>
    %22 = arith.subf %4, %6 : vector<8x128xf32>
    %cst = arith.constant -2.000000e-01 : f32
    %cst_7 = arith.constant 2.000000e-01 : f32
    %23 = vector.broadcast %cst : f32 to vector<8x128xf32>
    %24 = arith.maximumf %23, %22 : vector<8x128xf32>
    %25 = vector.broadcast %cst_7 : f32 to vector<8x128xf32>
    %26 = arith.minimumf %25, %24 : vector<8x128xf32>
    %27 = arith.subf %26, %8 : vector<8x128xf32>
    %28 = arith.mulf %27, %27 : vector<8x128xf32>
    %29 = arith.subf %22, %8 : vector<8x128xf32>
    %30 = arith.mulf %29, %29 : vector<8x128xf32>
    %31 = arith.maximumf %28, %30 : vector<8x128xf32>
    %c0_8 = arith.constant 0 : index
    %c0_9 = arith.constant 0 : index
    %32 = vector.load %arg5[%c0_8, %c0_9] : memref<8x128xi8, #tpu.memory_space<vmem>>, vector<8x128xi8>
    %33 = arith.sitofp %32 : vector<8x128xi8> to vector<8x128xf32>
    %34 = arith.mulf %31, %33 : vector<8x128xf32>
    %cst_10 = arith.constant 0.000000e+00 : f32
    %35 = vector.broadcast %cst_10 : f32 to vector<8x128xf32>
    %36 = arith.select %21, %34, %35 : vector<8x128xi1>, vector<8x128xf32>
    %cst_11 = arith.constant 0.000000e+00 : f32
    %37 = vector.broadcast %cst_11 : f32 to vector<8x128xf32>
    %38 = arith.select %21, %33, %37 : vector<8x128xi1>, vector<8x128xf32>
    %c0_12 = arith.constant 0 : index
    %c0_13 = arith.constant 0 : index
    %39 = vector.load %arg8[%c0_12, %c0_13] : memref<1x1xf32, #tpu.memory_space<vmem>>, vector<1x1xf32>
    %40 = vector.shape_cast %36 : vector<8x128xf32> to vector<1x8x128xf32>
    %cst_14 = arith.constant dense<0.000000e+00> : vector<1xf32>
    %41 = vector.multi_reduction <add>, %40, %cst_14 [1, 2] : vector<1x8x128xf32> to vector<1xf32>
    %42 = vector.shape_cast %41 : vector<1xf32> to vector<1x1x1xf32>
    %43 = vector.extract %42[0, 0, 0] : f32 from vector<1x1x1xf32>
    %44 = vector.broadcast %43 : f32 to vector<1x1xf32>
    %45 = arith.addf %39, %44 : vector<1x1xf32>
    %c0_15 = arith.constant 0 : index
    %c0_16 = arith.constant 0 : index
    %46 = vector.load %arg8[%c0_15, %c0_16] : memref<1x1xf32, #tpu.memory_space<vmem>>, vector<1x1xf32>
    tpu.vector_store %arg8[%c0_15, %c0_16], %45 {strides = array<i32>} : memref<1x1xf32, #tpu.memory_space<vmem>>, vector<1x1xf32>,
    %c0_17 = arith.constant 0 : index
    %c0_18 = arith.constant 0 : index
    %47 = vector.load %arg9[%c0_17, %c0_18] : memref<1x1xf32, #tpu.memory_space<vmem>>, vector<1x1xf32>
    %48 = vector.shape_cast %38 : vector<8x128xf32> to vector<1x8x128xf32>
    %cst_19 = arith.constant dense<0.000000e+00> : vector<1xf32>
    %49 = vector.multi_reduction <add>, %48, %cst_19 [1, 2] : vector<1x8x128xf32> to vector<1xf32>
    %50 = vector.shape_cast %49 : vector<1xf32> to vector<1x1x1xf32>
    %51 = vector.extract %50[0, 0, 0] : f32 from vector<1x1x1xf32>
    %52 = vector.broadcast %51 : f32 to vector<1x1xf32>
    %53 = arith.addf %47, %52 : vector<1x1xf32>
    %c0_20 = arith.constant 0 : index
    %c0_21 = arith.constant 0 : index
    %54 = vector.load %arg9[%c0_20, %c0_21] : memref<1x1xf32, #tpu.memory_space<vmem>>, vector<1x1xf32>
    tpu.vector_store %arg9[%c0_20, %c0_21], %53 {strides = array<i32>} : memref<1x1xf32, #tpu.memory_space<vmem>>, vector<1x1xf32>,
    %c3_i32 = arith.constant 3 : i32
    %55 = arith.cmpi eq, %arg1, %c3_i32 : i32
    %56 = arith.extui %55 : i1 to i32
    %c0_i32_22 = arith.constant 0 : i32
    %57 = arith.cmpi ne, %56, %c0_i32_22 : i32
    scf.if %57 {
      %c0_23 = arith.constant 0 : index
      %c0_24 = arith.constant 0 : index
      %58 = vector.load %arg8[%c0_23, %c0_24] : memref<1x1xf32, #tpu.memory_space<vmem>>, vector<1x1xf32>
      %59 = vector.shape_cast %58 : vector<1x1xf32> to vector<1x1x1xf32>
      %60 = vector.broadcast %59 : vector<1x1x1xf32> to vector<1x8x128xf32>
      %c0_25 = arith.constant 0 : index
      %c0_26 = arith.constant 0 : index
      %c0_27 = arith.constant 0 : index
      %61 = vector.load %arg6[%c0_25, %c0_26, %c0_27] : memref<1x8x128xf32, #tpu.memory_space<vmem>>, vector<1x8x128xf32>
      tpu.vector_store %arg6[%c0_25, %c0_26, %c0_27], %60 {strides = array<i32>} : memref<1x8x128xf32, #tpu.memory_space<vmem>>, vector<1x8x128xf32>,
      %c0_28 = arith.constant 0 : index
      %c0_29 = arith.constant 0 : index
      %62 = vector.load %arg9[%c0_28, %c0_29] : memref<1x1xf32, #tpu.memory_space<vmem>>, vector<1x1xf32>
      %63 = vector.shape_cast %62 : vector<1x1xf32> to vector<1x1x1xf32>
      %64 = vector.broadcast %63 : vector<1x1x1xf32> to vector<1x8x128xf32>
      %c0_30 = arith.constant 0 : index
      %c0_31 = arith.constant 0 : index
      %c0_32 = arith.constant 0 : index
      %65 = vector.load %arg7[%c0_30, %c0_31, %c0_32] : memref<1x8x128xf32, #tpu.memory_space<vmem>>, vector<1x8x128xf32>
      tpu.vector_store %arg7[%c0_30, %c0_31, %c0_32], %64 {strides = array<i32>} : memref<1x8x128xf32, #tpu.memory_space<vmem>>, vector<1x8x128xf32>,
    } else {
    }
    return
  }
  func.func @transform_0(%arg0: i32, %arg1: i32) -> (i32, i32) {
    %c0_i32 = arith.constant 0 : i32
    return %arg0, %arg1 : i32, i32
  }
  func.func @transform_1(%arg0: i32, %arg1: i32) -> (i32, i32) {
    %c0_i32 = arith.constant 0 : i32
    return %arg0, %arg1 : i32, i32
  }
  func.func @transform_2(%arg0: i32, %arg1: i32) -> (i32, i32) {
    %c0_i32 = arith.constant 0 : i32
    return %arg0, %arg1 : i32, i32
  }
  func.func @transform_3(%arg0: i32, %arg1: i32) -> (i32, i32) {
    %c0_i32 = arith.constant 0 : i32
    return %arg0, %arg1 : i32, i32
  }
  func.func @transform_4(%arg0: i32, %arg1: i32) -> (i32, i32, i32) {
    %c0_i32 = arith.constant 0 : i32
    %c0_i32_0 = arith.constant 0 : i32
    %c0_i32_1 = arith.constant 0 : i32
    return %arg0, %c0_i32, %c0_i32_0 : i32, i32, i32
  }
  func.func @transform_5(%arg0: i32, %arg1: i32) -> (i32, i32, i32) {
    %c0_i32 = arith.constant 0 : i32
    %c0_i32_0 = arith.constant 0 : i32
    %c0_i32_1 = arith.constant 0 : i32
    return %arg0, %c0_i32, %c0_i32_0 : i32, i32, i32
  }
}

</mosaic_0001>

<llo_original>
// kernel: tpu_custom_call.1
$region0: #{tpu_custom_call.1}
  #allocation0 [shape = 'u32[]', space=smem, size = 0x4, offset = 0x4, fixed_abs, tag = 'smem constant byte address 0x4 - core index']
  #allocation1 [shape = 'u32[144,128]{1,0:T(1,128)}', space=vmem, size = 0x12000, scoped, tag = 'internal scratch']
  #allocation2 [shape = 'f32[1,1]{1,0:T(1,128)}', space=vmem, size = 0x200, scoped, tag = 'scratch operand']
  #allocation3 [shape = 'f32[1,1]{1,0:T(1,128)}', space=vmem, size = 0x200, scoped, tag = 'scratch operand']
  %s0 = inlined_call_operand.hbm [shape: bf16[8,500], index: 0, kind: input, shape index: {}]
  %s1 = inlined_call_operand.hbm [shape: bf16[8,500], index: 1, kind: input, shape index: {}]
  %s2 = inlined_call_operand.hbm [shape: bf16[8,500], index: 2, kind: input, shape index: {}]
  %s3 = inlined_call_operand.hbm [shape: s8[8,500], index: 3, kind: input, shape index: {}]
  %s4 = inlined_call_operand.hbm [shape: f32[1,8,128], index: 4, kind: output, shape index: {0}]
  %s5 = inlined_call_operand.hbm [shape: f32[1,8,128], index: 5, kind: output, shape index: {1}]
  %6 = xla_tuple %s4, %s5
  %s7 = sld [smem:[#allocation0]]
  $region81: #{tpu_custom_call.1} parent=0
    _
  %s9 = ssub.s32 1, %s7
  %s10 = scalar_select 0, %s9, %s7
  $region1: #{tpu_custom_call.1} parent=0
    #allocation4 [shape = 'u8[4096]{0}', space=vmem, size = 0x1000, scoped, tag = 'input window, operand 0']
    #allocation5 [shape = 's32[2]{0}', space=sflag, size = 0x8, scoped, tag = 'scoped memory for tpu_custom_call.1']
    #allocation6 [shape = 's32[2]{0}', space=sflag, size = 0x8, scoped, tag = 'scoped memory for tpu_custom_call.1']
    #allocation7 [shape = 'u8[4096]{0}', space=vmem, size = 0x1000, scoped, tag = 'input window, operand 1']
    #allocation8 [shape = 's32[2]{0}', space=sflag, size = 0x8, scoped, tag = 'scoped memory for tpu_custom_call.1']
    #allocation9 [shape = 'u8[4096]{0}', space=vmem, size = 0x1000, scoped, tag = 'input window, operand 2']
    #allocation10 [shape = 'u8[2048]{0}', space=vmem, size = 0x800, scoped, tag = 'input window, operand 3']
    #allocation11 [shape = 's32[2]{0}', space=sflag, size = 0x8, scoped, tag = 'scoped memory for tpu_custom_call.1']
    #allocation12 [shape = 'u8[4096]{0}', space=vmem, size = 0x1000, scoped, tag = 'output window, operand 0, single buffered']
    #allocation13 [shape = 'u8[4096]{0}', space=vmem, size = 0x1000, scoped, tag = 'output window, operand 1, single buffered']
    #allocation14 [shape = 's32[1]{0}', space=sflag, size = 0x4, scoped, tag = 'scoped memory for tpu_custom_call.1']
    %11 = vsyncpa [#allocation5], 0
    %s12 = scalar_lea.sflag [#allocation5], 1
    %13 = vsyncpa %s12, 0
    %14 = vsyncpa [#allocation8], 0
    %s15 = scalar_lea.sflag [#allocation8], 1
    %16 = vsyncpa %s15, 0
    %17 = vsyncpa [#allocation11], 0
    %s18 = scalar_lea.sflag [#allocation11], 1
    %19 = vsyncpa %s18, 0
    %20 = vsyncpa [#allocation6], 0
    %21 = vsyncpa [#allocation14], 0
    loop: start=0, step=1, limit=6
    $region2: #{tpu_custom_call.1} parent=1 // loop_pre_header
      _
    $region3: #{tpu_custom_call.1} parent=1 // loop_header
      %s23 = sphi 0, %s27
      %p24 = scmp.ge.s32.totalorder %s23, 6
      %s30 = sphi 0, %s42
      %s31 = sphi 0, %s38
      %s32 = sphi 0, %s30
      %s33 = sphi 0, %s31
      %s34 = sphi 0, %s32
      %s35 = sphi 0, %s33
      %s47 = sphi 0, %s49
      %s50 = sphi 0, %s47
      %s51 = sphi 0, %s50
      %s67 = sphi 0, %s51
      %s75 = sphi 0, %s77
      %s78 = sphi 0, %s75
      %s79 = sphi 0, %s78
      %s95 = sphi 0, %s79
      %s103 = sphi 0, %s105
      %s106 = sphi 0, %s103
      %s107 = sphi 0, %s106
      %s123 = sphi 0, %s107
      %s131 = sphi 0, %s133
      %s134 = sphi 0, %s131
      %s135 = sphi 0, %s134
      %s151 = sphi 0, %s135
      %s157 = sphi 0, %s159
      %s160 = sphi 0, %s157
      %s161 = sphi 0, %s160
      %s177 = sphi 0, %s161
      %s183 = sphi 0, %s185
      %s186 = sphi 0, %s183
      %s187 = sphi 0, %s186
      %s203 = sphi 0, %s187
    $region4: #{tpu_custom_call.1} parent=1 // loop_header_branch
      %26 = sbr.rel (%p24) target = $region8
    $region5: #{tpu_custom_call.1} parent=1 // loop_body
      %s28 = ssub.s32 %s23, 1
      %s29 = ssub.s32 %s23, 2
      %s36 = sadd.s32 1, %s31
      %p37 = scmp.ge.s32.totalorder %s36, 4
      %s38 = scalar_select %p37, 0, %s36
      %s39 = sadd.s32 1, %s30
      %s40 = scalar_select %p37, %s39, %s30
      %p41 = scmp.ge.s32.totalorder %s40, 1
      %s42 = scalar_select %p41, 0, %s40
      %s43 = ssub.s32 %s30, %s42
      %s44 = ssub.s32 %s31, %s38
      %s45 = sor.u32 %s43, %s44
      %p46 = scmp.eq.s32.totalorder %s45, 0
      %s48 = sadd.s32 %s47, 1
      %s49 = scalar_select %p46, %s47, %s48
      %p52 = pneg %p46
      %p53 = scmp.eq.s32.totalorder %s23, 3
      %p54 = por %p52, %p53
      %p55 = scmp.ne.s32.totalorder %s47, %s50
      %p56 = scmp.eq.s32.totalorder %s23, 0
      %p57 = por %p55, %p56
      %p58 = scmp.ne.s32.totalorder %s47, %s50
      %p59 = scmp.eq.s32.totalorder %s28, 3
      %p60 = por %p58, %p59
      %p61 = scmp.ne.s32.totalorder %s50, %s51
      %p62 = scmp.eq.s32.totalorder %s28, 0
      %p63 = por %p61, %p62
      %p64 = scmp.ne.s32.totalorder %s50, %s51
      %p65 = scmp.eq.s32.totalorder %s29, 3
      %p66 = por %p64, %p65
      %p68 = scmp.ne.s32.totalorder %s51, %s67
      %p69 = scmp.eq.s32.totalorder %s29, 0
      %p70 = por %p68, %p69
      %s71 = ssub.s32 %s30, %s42
      %s72 = ssub.s32 %s31, %s38
      %s73 = sor.u32 %s71, %s72
      %p74 = scmp.eq.s32.totalorder %s73, 0
      %s76 = sadd.s32 %s75, 1
      %s77 = scalar_select %p74, %s75, %s76
      %p80 = pneg %p74
      %p81 = scmp.eq.s32.totalorder %s23, 3
      %p82 = por %p80, %p81
      %p83 = scmp.ne.s32.totalorder %s75, %s78
      %p84 = scmp.eq.s32.totalorder %s23, 0
      %p85 = por %p83, %p84
      %p86 = scmp.ne.s32.totalorder %s75, %s78
      %p87 = scmp.eq.s32.totalorder %s28, 3
      %p88 = por %p86, %p87
      %p89 = scmp.ne.s32.totalorder %s78, %s79
      %p90 = scmp.eq.s32.totalorder %s28, 0
      %p91 = por %p89, %p90
      %p92 = scmp.ne.s32.totalorder %s78, %s79
      %p93 = scmp.eq.s32.totalorder %s29, 3
      %p94 = por %p92, %p93
      %p96 = scmp.ne.s32.totalorder %s79, %s95
      %p97 = scmp.eq.s32.totalorder %s29, 0
      %p98 = por %p96, %p97
      %s99 = ssub.s32 %s30, %s42
      %s100 = ssub.s32 %s31, %s38
      %s101 = sor.u32 %s99, %s100
      %p102 = scmp.eq.s32.totalorder %s101, 0
      %s104 = sadd.s32 %s103, 1
      %s105 = scalar_select %p102, %s103, %s104
      %p108 = pneg %p102
      %p109 = scmp.eq.s32.totalorder %s23, 3
      %p110 = por %p108, %p109
      %p111 = scmp.ne.s32.totalorder %s103, %s106
      %p112 = scmp.eq.s32.totalorder %s23, 0
      %p113 = por %p111, %p112
      %p114 = scmp.ne.s32.totalorder %s103, %s106
      %p115 = scmp.eq.s32.totalorder %s28, 3
      %p116 = por %p114, %p115
      %p117 = scmp.ne.s32.totalorder %s106, %s107
      %p118 = scmp.eq.s32.totalorder %s28, 0
      %p119 = por %p117, %p118
      %p120 = scmp.ne.s32.totalorder %s106, %s107
      %p121 = scmp.eq.s32.totalorder %s29, 3
      %p122 = por %p120, %p121
      %p124 = scmp.ne.s32.totalorder %s107, %s123
      %p125 = scmp.eq.s32.totalorder %s29, 0
      %p126 = por %p124, %p125
      %s127 = ssub.s32 %s30, %s42
      %s128 = ssub.s32 %s31, %s38
      %s129 = sor.u32 %s127, %s128
      %p130 = scmp.eq.s32.totalorder %s129, 0
      %s132 = sadd.s32 %s131, 1
      %s133 = scalar_select %p130, %s131, %s132
      %p136 = pneg %p130
      %p137 = scmp.eq.s32.totalorder %s23, 3
      %p138 = por %p136, %p137
      %p139 = scmp.ne.s32.totalorder %s131, %s134
      %p140 = scmp.eq.s32.totalorder %s23, 0
      %p141 = por %p139, %p140
      %p142 = scmp.ne.s32.totalorder %s131, %s134
      %p143 = scmp.eq.s32.totalorder %s28, 3
      %p144 = por %p142, %p143
      %p145 = scmp.ne.s32.totalorder %s134, %s135
      %p146 = scmp.eq.s32.totalorder %s28, 0
      %p147 = por %p145, %p146
      %p148 = scmp.ne.s32.totalorder %s134, %s135
      %p149 = scmp.eq.s32.totalorder %s29, 3
      %p150 = por %p148, %p149
      %p152 = scmp.ne.s32.totalorder %s135, %s151
      %p153 = scmp.eq.s32.totalorder %s29, 0
      %p154 = por %p152, %p153
      %s155 = ssub.s32 %s30, %s42
      %p156 = scmp.eq.s32.totalorder %s155, 0
      %s158 = sadd.s32 %s157, 1
      %s159 = scalar_select %p156, %s157, %s158
      %p162 = pneg %p156
      %p163 = scmp.eq.s32.totalorder %s23, 3
      %p164 = por %p162, %p163
      %p165 = scmp.ne.s32.totalorder %s157, %s160
      %p166 = scmp.eq.s32.totalorder %s23, 0
      %p167 = por %p165, %p166
      %p168 = scmp.ne.s32.totalorder %s157, %s160
      %p169 = scmp.eq.s32.totalorder %s28, 3
      %p170 = por %p168, %p169
      %p171 = scmp.ne.s32.totalorder %s160, %s161
      %p172 = scmp.eq.s32.totalorder %s28, 0
      %p173 = por %p171, %p172
      %p174 = scmp.ne.s32.totalorder %s160, %s161
      %p175 = scmp.eq.s32.totalorder %s29, 3
      %p176 = por %p174, %p175
      %p178 = scmp.ne.s32.totalorder %s161, %s177
      %p179 = scmp.eq.s32.totalorder %s29, 0
      %p180 = por %p178, %p179
      %s181 = ssub.s32 %s30, %s42
      %p182 = scmp.eq.s32.totalorder %s181, 0
      %s184 = sadd.s32 %s183, 1
      %s185 = scalar_select %p182, %s183, %s184
      %p188 = pneg %p182
      %p189 = scmp.eq.s32.totalorder %s23, 3
      %p190 = por %p188, %p189
      %p191 = scmp.ne.s32.totalorder %s183, %s186
      %p192 = scmp.eq.s32.totalorder %s23, 0
      %p193 = por %p191, %p192
      %p194 = scmp.ne.s32.totalorder %s183, %s186
      %p195 = scmp.eq.s32.totalorder %s28, 3
      %p196 = por %p194, %p195
      %p197 = scmp.ne.s32.totalorder %s186, %s187
      %p198 = scmp.eq.s32.totalorder %s28, 0
      %p199 = por %p197, %p198
      %p200 = scmp.ne.s32.totalorder %s186, %s187
      %p201 = scmp.eq.s32.totalorder %s29, 3
      %p202 = por %p200, %p201
      %p204 = scmp.ne.s32.totalorder %s187, %s203
      %p205 = scmp.eq.s32.totalorder %s29, 0
      %p206 = por %p204, %p205
      %p207 = scmp.le.s32.totalorder 1, %s23
      %p208 = scmp.lt.s32.totalorder %s23, 5
      %p209 = pnand %p207, %p208
      %p210 = pneg %p209
      // Predicated region
      $region9: #{tpu_custom_call.1} parent=5 // pred_check
        _
      $region10: #{tpu_custom_call.1} parent=5 // pred_check_branch
        %212 = sbr.rel (%p209) target = $region12
      $region11: #{tpu_custom_call.1} parent=5 // pred_region
        %s213 = ssub.s32 %s23, 1
      $region12: #{tpu_custom_call.1} parent=5 // pred_fallthru
        _
      %p214 = scmp.lt.s32.totalorder %s23, 4
      // Predicated region
      $region13: #{tpu_custom_call.1} parent=5 // pred_check
        %p215 = pneg %p214
      $region14: #{tpu_custom_call.1} parent=5 // pred_check_branch
        %217 = sbr.rel (%p215) target = $region16
      $region15: #{tpu_custom_call.1} parent=5 // pred_region
        // Predicated region
        $region17: #{tpu_custom_call.1} parent=15 // pred_check
          %p218 = pneg %p57
        $region18: #{tpu_custom_call.1} parent=15 // pred_check_branch
          %220 = sbr.rel (%p218) target = $region20
        $region19: #{tpu_custom_call.1} parent=15 // pred_region
          %s221 = sand.u32 %s47, 1
          %s222 = scalar_lea.sflag [#allocation5], %s221
          %s223 = sand.u32 %s47, 1
          %s224 = smul.addr %s223, 4
          %s225 = scalar_lea.vmem [#allocation4], %s224
          %s227 = ssub.s32 64, 64
          %228 = vsyncadd %s222, %s227
          %s229 = smul.addr %s30, 4
          %s230 = sadd.s32 %s31, %s229
          %s231 = smul.addr %s230, 64
          %s232 = scalar_lea.hbm %s0, %s231
          %s234 = sshll.u32 %s225, 4
          %s235 = int_to_ptr.vmem [resolvable:$true] %s234
          %237 = dma.hbm_to_vmem [thread:$0]  %s232, 64, %s235, %s222
        $region20: #{tpu_custom_call.1} parent=15 // pred_fallthru
          _
        // Predicated region
        $region21: #{tpu_custom_call.1} parent=15 // pred_check
          %p238 = pneg %p85
        $region22: #{tpu_custom_call.1} parent=15 // pred_check_branch
          %240 = sbr.rel (%p238) target = $region24
        $region23: #{tpu_custom_call.1} parent=15 // pred_region
          %s241 = sand.u32 %s23, 1
          %s242 = scalar_lea.sflag [#allocation8], %s241
          %s243 = sand.u32 %s75, 1
          %s244 = smul.addr %s243, 4
          %s245 = scalar_lea.vmem [#allocation7], %s244
          %s247 = ssub.s32 64, 64
          %248 = vsyncadd %s242, %s247
          %s249 = smul.addr %s30, 4
          %s250 = sadd.s32 %s31, %s249
          %s251 = smul.addr %s250, 64
          %s252 = scalar_lea.hbm %s1, %s251
          %s254 = sshll.u32 %s245, 4
          %s255 = int_to_ptr.vmem [resolvable:$true] %s254
          %257 = dma.hbm_to_vmem [thread:$0]  %s252, 64, %s255, %s242
        $region24: #{tpu_custom_call.1} parent=15 // pred_fallthru
          _
        // Predicated region
        $region25: #{tpu_custom_call.1} parent=15 // pred_check
          %p258 = pneg %p113
        $region26: #{tpu_custom_call.1} parent=15 // pred_check_branch
          %260 = sbr.rel (%p258) target = $region28
        $region27: #{tpu_custom_call.1} parent=15 // pred_region
          %s261 = sand.u32 %s23, 1
          %s262 = scalar_lea.sflag [#allocation8], %s261
          %s263 = sand.u32 %s103, 1
          %s264 = smul.addr %s263, 4
          %s265 = scalar_lea.vmem [#allocation9], %s264
          %s267 = ssub.s32 64, 64
          %268 = vsyncadd %s262, %s267
          %s269 = smul.addr %s30, 4
          %s270 = sadd.s32 %s31, %s269
          %s271 = smul.addr %s270, 64
          %s272 = scalar_lea.hbm %s2, %s271
          %s274 = sshll.u32 %s265, 4
          %s275 = int_to_ptr.vmem [resolvable:$true] %s274
          %277 = dma.hbm_to_vmem [thread:$0]  %s272, 64, %s275, %s262
        $region28: #{tpu_custom_call.1} parent=15 // pred_fallthru
          _
        // Predicated region
        $region29: #{tpu_custom_call.1} parent=15 // pred_check
          %p278 = pneg %p141
        $region30: #{tpu_custom_call.1} parent=15 // pred_check_branch
          %280 = sbr.rel (%p278) target = $region32
        $region31: #{tpu_custom_call.1} parent=15 // pred_region
          %s281 = sand.u32 %s131, 1
          %s282 = scalar_lea.sflag [#allocation11], %s281
          %s283 = sand.u32 %s131, 1
          %s284 = smul.addr %s283, 2
          %s285 = scalar_lea.vmem [#allocation10], %s284
          %s287 = ssub.s32 32, 32
          %288 = vsyncadd %s282, %s287
          %s289 = smul.addr %s30, 4
          %s290 = sadd.s32 %s31, %s289
          %s291 = smul.addr %s290, 32
          %s292 = scalar_lea.hbm %s3, %s291
          %s294 = sshll.u32 %s285, 4
          %s295 = int_to_ptr.vmem [resolvable:$true] %s294
          %297 = dma.hbm_to_vmem [thread:$0]  %s292, 32, %s295, %s282
        $region32: #{tpu_custom_call.1} parent=15 // pred_fallthru
          _
      $region16: #{tpu_custom_call.1} parent=5 // pred_fallthru
        _
      %p298 = scmp.le.s32.totalorder 1, %s23
      %p299 = scmp.lt.s32.totalorder %s23, 5
      %p300 = pnand %p298, %p299
      %p301 = pneg %p300
      // Predicated region
      $region33: #{tpu_custom_call.1} parent=5 // pred_check
        _
      $region34: #{tpu_custom_call.1} parent=5 // pred_check_branch
        %303 = sbr.rel (%p300) target = $region36
      $region35: #{tpu_custom_call.1} parent=5 // pred_region
        %s304 = ssub.s32 %s23, 1
        %s305 = sand.u32 %s50, 1
        %s306 = scalar_lea.sflag [#allocation5], %s305
        %s307 = sand.u32 %s50, 1
        %s308 = smul.addr %s307, 4
        %s309 = scalar_lea.vmem [#allocation4], %s308
        // Predicated region
        $region37: #{tpu_custom_call.1} parent=35 // pred_check
          %p310 = pneg %p63
        $region38: #{tpu_custom_call.1} parent=35 // pred_check_branch
          %312 = sbr.rel (%p310) target = $region40
        $region39: #{tpu_custom_call.1} parent=35 // pred_region
          %313 = dma.done %s306, 64
        $region40: #{tpu_custom_call.1} parent=35 // pred_fallthru
          _
        %s314 = sand.u32 %s28, 1
        %s315 = scalar_lea.sflag [#allocation8], %s314
        %s316 = sand.u32 %s78, 1
        %s317 = smul.addr %s316, 4
        %s318 = scalar_lea.vmem [#allocation7], %s317
        // Predicated region
        $region41: #{tpu_custom_call.1} parent=35 // pred_check
          %p319 = pneg %p91
        $region42: #{tpu_custom_call.1} parent=35 // pred_check_branch
          %321 = sbr.rel (%p319) target = $region44
        $region43: #{tpu_custom_call.1} parent=35 // pred_region
          %322 = dma.done %s315, 64
        $region44: #{tpu_custom_call.1} parent=35 // pred_fallthru
          _
        %s323 = sand.u32 %s28, 1
        %s324 = scalar_lea.sflag [#allocation8], %s323
        %s325 = sand.u32 %s106, 1
        %s326 = smul.addr %s325, 4
        %s327 = scalar_lea.vmem [#allocation9], %s326
        // Predicated region
        $region45: #{tpu_custom_call.1} parent=35 // pred_check
          %p328 = pneg %p119
        $region46: #{tpu_custom_call.1} parent=35 // pred_check_branch
          %330 = sbr.rel (%p328) target = $region48
        $region47: #{tpu_custom_call.1} parent=35 // pred_region
          %331 = dma.done %s324, 64
        $region48: #{tpu_custom_call.1} parent=35 // pred_fallthru
          _
        %s332 = sand.u32 %s134, 1
        %s333 = scalar_lea.sflag [#allocation11], %s332
        %s334 = sand.u32 %s134, 1
        %s335 = smul.addr %s334, 2
        %s336 = scalar_lea.vmem [#allocation10], %s335
        // Predicated region
        $region49: #{tpu_custom_call.1} parent=35 // pred_check
          %p337 = pneg %p147
        $region50: #{tpu_custom_call.1} parent=35 // pred_check_branch
          %339 = sbr.rel (%p337) target = $region52
        $region51: #{tpu_custom_call.1} parent=35 // pred_region
          %340 = dma.done %s333, 32
        $region52: #{tpu_custom_call.1} parent=35 // pred_fallthru
          _
        %s341 = sand.u32 %s50, 1
        %s342 = scalar_lea.sflag [#allocation5], %s341
        %s343 = sand.u32 %s50, 1
        %s344 = smul.addr %s343, 4
        %s345 = scalar_lea.vmem [#allocation4], %s344
        %p346 = pneg %p63
        %p347 = pneg %p60
        %s348 = sand.u32 %s28, 1
        %s349 = scalar_lea.sflag [#allocation8], %s348
        %s350 = sand.u32 %s78, 1
        %s351 = smul.addr %s350, 4
        %s352 = scalar_lea.vmem [#allocation7], %s351
        %p353 = pneg %p91
        %p354 = pneg %p88
        %s355 = sand.u32 %s28, 1
        %s356 = scalar_lea.sflag [#allocation8], %s355
        %s357 = sand.u32 %s106, 1
        %s358 = smul.addr %s357, 4
        %s359 = scalar_lea.vmem [#allocation9], %s358
        %p360 = pneg %p119
        %p361 = pneg %p116
        %s362 = sand.u32 %s134, 1
        %s363 = scalar_lea.sflag [#allocation11], %s362
        %s364 = sand.u32 %s134, 1
        %s365 = smul.addr %s364, 2
        %s366 = scalar_lea.vmem [#allocation10], %s365
        %p367 = pneg %p147
        %p368 = pneg %p144
        %p369 = pneg %p173
        %p370 = pneg %p170
        %p371 = pneg %p199
        %p372 = pneg %p196
        %p373 = scmp.eq.s32.totalorder %s33, 0
        // Predicated region
        $region53: #{tpu_custom_call.1} parent=35 // pred_check
          %p374 = pneg %p373
        $region54: #{tpu_custom_call.1} parent=35 // pred_check_branch
          %376 = sbr.rel (%p374) target = $region56
        $region55: #{tpu_custom_call.1} parent=35 // pred_region
          %vm377 = vcmask 0
          %378 = vst.msk [vmem:[#allocation2] sm:$0x1] %vm377, 0.0
          %379 = vst.msk [vmem:[#allocation3] sm:$0x1] %vm377, 0.0
        $region56: #{tpu_custom_call.1} parent=35 // pred_fallthru
          _
        %v380 = vld [vmem:[%s309] sm:$0xf]
        %v381 = vunpack.c.l.bf16 %v380
        %v382 = vld [vmem:[%s318] sm:$0xf]
        %v383 = vunpack.c.l.bf16 %v382
        %v384 = vld [vmem:[%s327] sm:$0xf]
        %v385 = vunpack.c.l.bf16 %v384
        %s386 = smul.u32 %s32, 8
        %v387 = vlaneseq
        %v388 = vshrl.u32 %v387, 7
        %v389 = vstv %s386
        %v390 = vadd.s32 %v389, %v388
        %s391 = smul.u32 %s33, 128
        %v392 = vlaneseq
        %v393 = vand.u32 %v392, 127
        %v394 = vstv %s391
        %v395 = vadd.s32 %v394, %v393
        %vm396 = vcmp.lt.s32.totalorder %v390, 8
        %vm397 = vcmp.lt.s32.totalorder %v395, 500
        %vm398 = vmand %vm396, %vm397
        %v399 = vsub.f32 %v381, %v383
        %v400 = vmax.f32 %v399, -0.2
        %v401 = vmin.f32 %v400, 0.2
        %v402 = vsub.f32 %v401, %v385
        %v403 = vmul.f32 %v402, %v402
        %v404 = vsub.f32 %v399, %v385
        %v405 = vmul.f32 %v404, %v404
        %v406 = vmax.f32 %v403, %v405
        %v407 = vld [vmem:[%s336] sm:$0x3]
        %v408 = vunpack.c.0.s8 %v407
        %v409 = vcvt.s32.f32 %v408
        %v410 = vmul.f32 %v406, %v409
        %v411 = vsel %vm398, %v410, 0.0
        %v412 = vsel %vm398, %v409, 0.0
        %v413 = vld [vmem:[#allocation2] sm:$0x1]
        %414 = vadd.xlane.f32.xlu0 %v411
        %v415 = vpop.xlane.xlu0 %414
        %v416 = vrot.slane %v415, 4
        %v417 = vadd.f32 %v415, %v416
        %v418 = vrot.slane %v417, 2
        %v419 = vadd.f32 %v417, %v418
        %v420 = vrot.slane %v419, 1
        %v421 = vadd.f32 %v419, %v420
        %s422 = vtos %v421
        %v423 = vstv %s422
        %v424 = vadd.f32 %v413, %v423
        %vm425 = vcmask 0
        %426 = vst.msk [vmem:[#allocation2] sm:$0x1] %vm425, %v424
        %v427 = vld [vmem:[#allocation3] sm:$0x1]
        %428 = vadd.xlane.f32.xlu0 %v412
        %v429 = vpop.xlane.xlu0 %428
        %v430 = vrot.slane %v429, 4
        %v431 = vadd.f32 %v429, %v430
        %v432 = vrot.slane %v431, 2
        %v433 = vadd.f32 %v431, %v432
        %v434 = vrot.slane %v433, 1
        %v435 = vadd.f32 %v433, %v434
        %s436 = vtos %v435
        %v437 = vstv %s436
        %v438 = vadd.f32 %v427, %v437
        %439 = vst.msk [vmem:[#allocation3] sm:$0x1] %vm425, %v438
        %p440 = scmp.eq.s32.totalorder %s33, 3
        // Predicated region
        $region57: #{tpu_custom_call.1} parent=35 // pred_check
          %p441 = pneg %p440
        $region58: #{tpu_custom_call.1} parent=35 // pred_check_branch
          %443 = sbr.rel (%p441) target = $region60
        $region59: #{tpu_custom_call.1} parent=35 // pred_region
          %v444 = vld [vmem:[#allocation2] sm:$0x1]
          %v446 = vlaneseq
          %v447 = vshrl.u32 %v446, 7
          %v448 = vsub.s32 0, %v447
          %v449 = vrot.slane %v444, %v448
          %450 = vset.pattern.permute.xlu0 0
          %451 = vperm.xlu0 %450, %v449
          %v452 = vpop.permute.xlu0 %451
          %454 = vst [vmem:[#allocation12] sm:$0xff] %v452
          %v455 = vld [vmem:[#allocation3] sm:$0x1]
          %v457 = vlaneseq
          %v458 = vshrl.u32 %v457, 7
          %v459 = vsub.s32 0, %v458
          %v460 = vrot.slane %v455, %v459
          %461 = vset.pattern.permute.xlu0 0
          %462 = vperm.xlu0 %461, %v460
          %v463 = vpop.permute.xlu0 %462
          %465 = vst [vmem:[#allocation13] sm:$0xff] %v463
        $region60: #{tpu_custom_call.1} parent=35 // pred_fallthru
          _
        // Predicated region
        $region61: #{tpu_custom_call.1} parent=35 // pred_check
          %p466 = pneg %p170
        $region62: #{tpu_custom_call.1} parent=35 // pred_check_branch
          %468 = sbr.rel (%p466) target = $region64
        $region63: #{tpu_custom_call.1} parent=35 // pred_region
          %s470 = ssub.s32 128, 128
          %471 = vsyncadd [#allocation6], %s470
          %s472 = smul.addr %s32, 128
          %s473 = scalar_lea.hbm %s4, %s472
          %s475 = sshll.u32 [#allocation12], 4
          %s476 = int_to_ptr.vmem [resolvable:$true] %s475
          %478 = dma.vmem_to_hbm [thread:$0]  %s476, 128, %s473, [#allocation6]
        $region64: #{tpu_custom_call.1} parent=35 // pred_fallthru
          _
        // Predicated region
        $region65: #{tpu_custom_call.1} parent=35 // pred_check
          %p479 = pneg %p196
        $region66: #{tpu_custom_call.1} parent=35 // pred_check_branch
          %481 = sbr.rel (%p479) target = $region68
        $region67: #{tpu_custom_call.1} parent=35 // pred_region
          %s483 = ssub.s32 128, 128
          %484 = vsyncadd [#allocation14], %s483
          %s485 = smul.addr %s32, 128
          %s486 = scalar_lea.hbm %s5, %s485
          %s488 = sshll.u32 [#allocation13], 4
          %s489 = int_to_ptr.vmem [resolvable:$true] %s488
          %491 = dma.vmem_to_hbm [thread:$0]  %s489, 128, %s486, [#allocation14]
        $region68: #{tpu_custom_call.1} parent=35 // pred_fallthru
          _
        // Predicated region
        $region69: #{tpu_custom_call.1} parent=35 // pred_check
          %p492 = pneg %p170
        $region70: #{tpu_custom_call.1} parent=35 // pred_check_branch
          %494 = sbr.rel (%p492) target = $region72
        $region71: #{tpu_custom_call.1} parent=35 // pred_region
          %495 = dma.done [#allocation6], 128
        $region72: #{tpu_custom_call.1} parent=35 // pred_fallthru
          _
        // Predicated region
        $region73: #{tpu_custom_call.1} parent=35 // pred_check
          %p496 = pneg %p196
        $region74: #{tpu_custom_call.1} parent=35 // pred_check_branch
          %498 = sbr.rel (%p496) target = $region76
        $region75: #{tpu_custom_call.1} parent=35 // pred_region
          %499 = dma.done [#allocation14], 128
        $region76: #{tpu_custom_call.1} parent=35 // pred_fallthru
          _
      $region36: #{tpu_custom_call.1} parent=5 // pred_fallthru
        _
      %p500 = scmp.le.s32.totalorder 2, %s23
      // Predicated region
      $region77: #{tpu_custom_call.1} parent=5 // pred_check
        %p501 = pneg %p500
      $region78: #{tpu_custom_call.1} parent=5 // pred_check_branch
        %503 = sbr.rel (%p501) target = $region80
      $region79: #{tpu_custom_call.1} parent=5 // pred_region
        %s504 = ssub.s32 %s23, 2
      $region80: #{tpu_custom_call.1} parent=5 // pred_fallthru
        _
    $region6: #{tpu_custom_call.1} parent=1 // loop_footer
      %s27 = sadd.s32 1, %s23
    $region7: #{tpu_custom_call.1} parent=1 // loop_footer_branch
      %22 = sbr.rel target = $region3
    $region8: #{tpu_custom_call.1} parent=1 // loop_exit
      _
    %505 = vsyncpa [#allocation5], 1
    %s506 = scalar_lea.sflag [#allocation5], 1
    %507 = vsyncpa %s506, 1
    %508 = vsyncpa [#allocation8], 1
    %s509 = scalar_lea.sflag [#allocation8], 1
    %510 = vsyncpa %s509, 1
    %511 = vsyncpa [#allocation11], 1
    %s512 = scalar_lea.sflag [#allocation11], 1
    %513 = vsyncpa %s512, 1
    %514 = vsyncpa [#allocation6], 1
    %s515 = scalar_lea.sflag [#allocation6], 1
    %516 = vsyncpa %s515, 1
    %517 = vsyncpa [#allocation14], 1

</llo_original>
